<compile_context>
chip_gen: v7x
topology: tpu7x:2x2x1
jax: 0.10.0
libtpu: 0.0.40
codegen_flags: <defaults>
</compile_context>

<pallas_src>
import jax
import jax.numpy as jnp
from jax import lax
from jax.experimental import pallas as pl
from jax.experimental.pallas import tpu as pltpu

_EPS_IN = 1e-5              # nn.InstanceNorm2d default eps
_WEIGHTS = [1.0, 1.0, 1.0, 1.0]
_VMEM_LIMIT = 48 * 1024 * 1024


def _inorm(x):
    """InstanceNorm2d (affine=False): normalize each feature row over HW (lanes)."""
    mu = jnp.mean(x, axis=-1, keepdims=True)
    var = jnp.mean((x - mu) * (x - mu), axis=-1, keepdims=True)
    return (x - mu) * lax.rsqrt(var + _EPS_IN)


# ---------------------------------------------------------------------------
# Fused triplet kernel: one step, whole batch, a-features computed once.
# ---------------------------------------------------------------------------
def _triplet_kernel(a_ref, p_ref, n_ref, wt_ref, out_ref):
    """a/p/n: (N, C, HW) f32; wt: (F, C) f32; out: (N, 2, HW) f32 lane-dense
    partial sums (summed over the F sublane axis only)."""
    wt = wt_ref[...]
    num_b = a_ref.shape[0]
    for b in range(num_b):                         # static unroll over batch
        fa = _inorm(jnp.dot(wt, a_ref[b], preferred_element_type=jnp.float32))
        fp = _inorm(jnp.dot(wt, p_ref[b], preferred_element_type=jnp.float32))
        fn = _inorm(jnp.dot(wt, n_ref[b], preferred_element_type=jnp.float32))
        dap = fa - fp
        dan = fa - fn
        out_ref[b, 0:1, :] = jnp.sum(dap * dap, axis=0, keepdims=True)
        out_ref[b, 1:2, :] = jnp.sum(dan * dan, axis=0, keepdims=True)


def _pair_kernel(a_ref, b_ref, wt_ref, out_ref):
    """Single-pair variant (ablation paths).  out: (N, HW) lane-dense partials."""
    wt = wt_ref[...]
    num_b = a_ref.shape[0]
    for i in range(num_b):
        fa = _inorm(jnp.dot(wt, a_ref[i], preferred_element_type=jnp.float32))
        fb = _inorm(jnp.dot(wt, b_ref[i], preferred_element_type=jnp.float32))
        d = fa - fb
        out_ref[i:i + 1, :] = jnp.sum(d * d, axis=0, keepdims=True)


# ---------------------------------------------------------------------------
# Grouped-negatives kernel (group_n == 1): grid over negatives, `a` resident.
# ---------------------------------------------------------------------------
def _grouped_kernel(a_ref, p_ref, n_ref, wt_ref, ap_ref, an_ref, fa_ref):
    """grid=(J,) over negatives ('arbitrary').

    a_ref/p_ref : (N, C, HW) f32, constant block index -> DMA'd once, resident
    n_ref       : (1, N, C, HW) f32, block j of the stacked negatives
    wt_ref      : (F, C) f32
    ap_ref      : (N, HW) f32  written once at j==0 (resident output block)
    an_ref      : (N, HW) f32  accumulated across the negatives axis
    fa_ref      : VMEM scratch (N, F, HW) f32 -- InstanceNorm(vgg(a)), computed once
    """
    j = pl.program_id(0)
    wt = wt_ref[...]
    num_b = a_ref.shape[0]
    hw = a_ref.shape[2]

    @pl.when(j == 0)
    def _init():
        for b in range(num_b):
            fa = _inorm(jnp.dot(wt, a_ref[b], preferred_element_type=jnp.float32))
            fa_ref[b] = fa
            fp = _inorm(jnp.dot(wt, p_ref[b], preferred_element_type=jnp.float32))
            d = fa - fp
            ap_ref[b:b + 1, :] = jnp.sum(d * d, axis=0, keepdims=True)
            an_ref[b:b + 1, :] = jnp.zeros((1, hw), jnp.float32)

    for b in range(num_b):
        fn = _inorm(jnp.dot(wt, n_ref[0, b], preferred_element_type=jnp.float32))
        d = fa_ref[b] - fn
        an_ref[b:b + 1, :] = an_ref[b:b + 1, :] + jnp.sum(d * d, axis=0, keepdims=True)


# ---------------------------------------------------------------------------
# Wrappers
# ---------------------------------------------------------------------------
def _flatten(x_nchw):
    """NCHW -> (N, C, HW) f32.  Pure reshape; no cast, no HBM transpose."""
    N, C, H, W = x_nchw.shape
    return x_nchw.reshape(N, C, H * W).astype(jnp.float32)


def compute_vgg_loss_fused(a_nchw, p_nchw, n_nchw, w):
    """d_ap, d_an = perceptual(a,p), perceptual(a,n) in a single pallas_call."""
    N, C, H, W = a_nchw.shape
    HW = H * W
    F = w.shape[1]
    a, p, n = _flatten(a_nchw), _flatten(p_nchw), _flatten(n_nchw)
    wt = jnp.transpose(w).astype(jnp.float32)      # (F, C), tiny

    in_spec = pl.BlockSpec((N, C, HW), lambda i: (0, 0, 0))
    partials = pl.pallas_call(
        _triplet_kernel,
        out_shape=jax.ShapeDtypeStruct((N, 2, HW), jnp.float32),
        grid=(1,),                                  # one fat step: whole batch
        in_specs=[in_spec, in_spec, in_spec,
                  pl.BlockSpec((F, C), lambda i: (0, 0))],
        out_specs=pl.BlockSpec((N, 2, HW), lambda i: (0, 0, 0)),
        compiler_params=pltpu.CompilerParams(
            dimension_semantics=("arbitrary",),
            vmem_limit_bytes=_VMEM_LIMIT),
    )(a, p, n, wt)

    total = jnp.float32(N * F * HW)
    d_ap = jnp.sum(partials[:, 0, :]) / total
    d_an = jnp.sum(partials[:, 1, :]) / total
    return d_ap, d_an


def compute_vgg_loss_pair(a_nchw, b_nchw, w):
    """Single-pair perceptual distance (scalar). Used by the ablation paths."""
    N, C, H, W = a_nchw.shape
    HW = H * W
    F = w.shape[1]
    a, b = _flatten(a_nchw), _flatten(b_nchw)
    wt = jnp.transpose(w).astype(jnp.float32)

    in_spec = pl.BlockSpec((N, C, HW), lambda i: (0, 0, 0))
    partials = pl.pallas_call(
        _pair_kernel,
        out_shape=jax.ShapeDtypeStruct((N, HW), jnp.float32),
        grid=(1,),
        in_specs=[in_spec, in_spec, pl.BlockSpec((F, C), lambda i: (0, 0))],
        out_specs=pl.BlockSpec((N, HW), lambda i: (0, 0)),
        compiler_params=pltpu.CompilerParams(
            dimension_semantics=("arbitrary",),
            vmem_limit_bytes=_VMEM_LIMIT),
    )(a, b, wt)

    return jnp.sum(partials) / jnp.float32(N * F * HW)


def compute_vgg_loss_grouped(a_nchw, p_nchw, n_list, w):
    """group_n==1: d_ap = perceptual(a,p); d_an = sum_j perceptual(a, n_j).

    `a` is read from HBM once and InstanceNorm(vgg(a)) is computed once and
    kept resident in VMEM scratch across the negatives grid axis.
    """
    N, C, H, W = a_nchw.shape
    HW = H * W
    F = w.shape[1]
    J = len(n_list)
    a, p = _flatten(a_nchw), _flatten(p_nchw)
    n = jnp.stack([_flatten(x) for x in n_list], axis=0)   # (J, N, C, HW)
    wt = jnp.transpose(w).astype(jnp.float32)

    const_spec = pl.BlockSpec((N, C, HW), lambda j: (0, 0, 0))
    ap_part, an_part = pl.pallas_call(
        _grouped_kernel,
        out_shape=(jax.ShapeDtypeStruct((N, HW), jnp.float32),
                   jax.ShapeDtypeStruct((N, HW), jnp.float32)),
        grid=(J,),
        in_specs=[const_spec, const_spec,
                  pl.BlockSpec((1, N, C, HW), lambda j: (j, 0, 0, 0)),
                  pl.BlockSpec((F, C), lambda j: (0, 0))],
        out_specs=(pl.BlockSpec((N, HW), lambda j: (0, 0)),
                   pl.BlockSpec((N, HW), lambda j: (0, 0))),
        scratch_shapes=[pltpu.VMEM((N, F, HW), jnp.float32)],
        compiler_params=pltpu.CompilerParams(
            dimension_semantics=("arbitrary",),     # resident scratch/output carry
            vmem_limit_bytes=_VMEM_LIMIT),
    )(a, p, n, wt)

    total = jnp.float32(N * F * HW)
    d_ap = jnp.sum(ap_part) / total
    d_an = jnp.sum(an_part) / total
    return d_ap, d_an


def contrast_loss(a, p, n, vgg_w, *, mode="single", group_n=0, ablation=False):
    """Reproduces ContrastLoss.forward semantics.

    mode='single'  : a, p, n are single NCHW tensors; the PyTorch loop runs
                     len(a) identical iterations -> hoisted to one evaluation
                     multiplied by sum(weights[:len(a)]) (identical math).
    mode='multiple': a, p, n are lists of NCHW tensors.
    group_n=1      : n (or n[i]) is a list of negatives summed into d_an
                     (capped at 16 in 'single' mode, matching `if j > 15: break`).
    """
    loss = jnp.float32(0.0)

    if group_n == 0:
        if mode == "single":
            wsum = float(sum(_WEIGHTS[: len(a)]))
            if not ablation:
                d_ap, d_an = compute_vgg_loss_fused(a, p, n, vgg_w)
                contrastive = d_ap / (d_an + 1e-7)
            else:
                contrastive = compute_vgg_loss_pair(a, p, vgg_w)
            loss = wsum * contrastive
        elif mode == "multiple":
            for i in range(len(a)):
                if not ablation:
                    d_ap, d_an = compute_vgg_loss_fused(a[i], p[i], n[i], vgg_w)
                    contrastive = d_ap / (d_an + 1e-7)
                else:
                    contrastive = compute_vgg_loss_pair(a[i], p[i], vgg_w)
                loss = loss + _WEIGHTS[i] * contrastive
        return loss

    elif group_n == 1:
        if mode == "single":
            wsum = float(sum(_WEIGHTS[: len(a)]))
            if not ablation:
                d_ap, d_an = compute_vgg_loss_grouped(a, p, list(n)[:16], vgg_w)
                contrastive = d_ap / (d_an + 1e-7)
            else:
                contrastive = compute_vgg_loss_pair(a, p, vgg_w)
            loss = wsum * contrastive
        elif mode == "multiple":
            for i in range(len(a)):
                if not ablation:
                    d_ap, d_an = compute_vgg_loss_grouped(a[i], p[i], list(n[i]), vgg_w)
                    contrastive = d_ap / (d_an + 1e-7)
                else:
                    contrastive = compute_vgg_loss_pair(a[i], p[i], vgg_w)
                loss = loss + _WEIGHTS[i] * contrastive
        return loss


# ---------------------------------------------------------------------------
# Pure-JAX reference for validation
# ---------------------------------------------------------------------------
def _ref_vgg_dist(x, y, w):
    def feats(z):
        N, C, H, W = z.shape
        f = jnp.einsum("cf,nchw->nfhw", w, z).reshape(N, w.shape[1], H * W)
        mu = jnp.mean(f, axis=-1, keepdims=True)
        var = jnp.mean((f - mu) ** 2, axis=-1, keepdims=True)
        return (f - mu) / jnp.sqrt(var + _EPS_IN)
    return jnp.mean((feats(x) - feats(y)) ** 2)


if __name__ == "__main__":
    key = jax.random.PRNGKey(0)
    ka, kp, kn, kw = jax.random.split(key, 4)

    N, C, H, W = 2, 4, 16, 16    # NCHW, batch<=4 so weights[i] is defined
    F = 8                        # synthetic "vgg" feature channels

    a = jax.random.normal(ka, (N, C, H, W), dtype=jnp.float32)
    p = a + 0.1 * jax.random.normal(kp, (N, C, H, W), dtype=jnp.float32)
    n = jax.random.normal(kn, (N, C, H, W), dtype=jnp.float32)

    # Deterministic synthetic 1x1-conv "vgg" weight.
    vgg_w = 0.1 * jax.random.normal(kw, (C, F), dtype=jnp.float32)

    # --- group_n = 0, mode='single' (fused triplet kernel) -----------------
    loss = contrast_loss(a, p, n, vgg_w, mode="single", group_n=0, ablation=False)
    loss = jax.block_until_ready(loss)
    assert loss.shape == () and bool(jnp.isfinite(loss))

    d_ap_k, d_an_k = compute_vgg_loss_fused(a, p, n, vgg_w)
    d_ap_r, d_an_r = _ref_vgg_dist(a, p, vgg_w), _ref_vgg_dist(a, n, vgg_w)
    assert bool(jnp.allclose(d_ap_k, d_ap_r, rtol=2e-2, atol=1e-4))
    assert bool(jnp.allclose(d_an_k, d_an_r, rtol=2e-2, atol=1e-4))

    # --- group_n = 1, mode='single' (grouped negatives, `a` resident) ------
    negs = [jax.random.normal(jax.random.fold_in(kn, j), (N, C, H, W),
                              dtype=jnp.float32) for j in range(3)]
    loss_g = contrast_loss(a, p, negs, vgg_w, mode="single", group_n=1, ablation=False)
    loss_g = jax.block_until_ready(loss_g)
    assert bool(jnp.isfinite(loss_g))

    d_ap_g, d_an_g = compute_vgg_loss_grouped(a, p, negs, vgg_w)
    d_an_ref = sum(_ref_vgg_dist(a, x, vgg_w) for x in negs)
    assert bool(jnp.allclose(d_ap_g, d_ap_r, rtol=2e-2, atol=1e-4))
    assert bool(jnp.allclose(d_an_g, d_an_ref, rtol=2e-2, atol=1e-4))

    print("KERNEL_OK")
</pallas_src>

<mosaic_0001>
module attributes {stable_mosaic.version = 11 : i64} {
  func.func @_triplet_kernel(%arg0: i32, %arg1: memref<2x4x256xf32, #tpu.memory_space<vmem>>, %arg2: memref<2x4x256xf32, #tpu.memory_space<vmem>>, %arg3: memref<2x4x256xf32, #tpu.memory_space<vmem>>, %arg4: memref<8x4xf32, #tpu.memory_space<vmem>>, %arg5: memref<2x2x256xf32, #tpu.memory_space<vmem>>) attributes {dimension_semantics = [#tpu.dimension_semantics<arbitrary>], iteration_bounds = array<i64: 1>, scalar_prefetch = 0 : i64, scratch_operands = 0 : i64, tpu.core_type = #tpu.core_type<tc>, window_params = [{pipeline_mode = #tpu.pipeline_mode<synchronous>, transform_indices = @transform_0, window_bounds = array<i64: 2, 4, 256>}, {pipeline_mode = #tpu.pipeline_mode<synchronous>, transform_indices = @transform_1, window_bounds = array<i64: 2, 4, 256>}, {pipeline_mode = #tpu.pipeline_mode<synchronous>, transform_indices = @transform_2, window_bounds = array<i64: 2, 4, 256>}, {pipeline_mode = #tpu.pipeline_mode<synchronous>, transform_indices = @transform_3, window_bounds = array<i64: 8, 4>}, {pipeline_mode = #tpu.pipeline_mode<synchronous>, transform_indices = @transform_4, window_bounds = array<i64: 2, 2, 256>}]} {
    %c0 = arith.constant 0 : index
    %c0_0 = arith.constant 0 : index
    %0 = vector.load %arg4[%c0, %c0_0] : memref<8x4xf32, #tpu.memory_space<vmem>>, vector<8x4xf32>
    %c0_1 = arith.constant 0 : index
    %c0_2 = arith.constant 0 : index
    %c0_3 = arith.constant 0 : index
    %1 = vector.load %arg1[%c0_1, %c0_2, %c0_3] : memref<2x4x256xf32, #tpu.memory_space<vmem>>, vector<1x4x256xf32>
    %2 = vector.shape_cast %1 : vector<1x4x256xf32> to vector<4x256xf32>
    %cst = arith.constant dense<0.000000e+00> : vector<8x256xf32>
    %3 = tpu.matmul %0, %2, %cst {dimension_numbers = #tpu.dot_dimension_numbers<[1], [0], [0], [1], [0, 0, 1, 1], [], []>} : vector<8x4xf32>, vector<4x256xf32>, vector<8x256xf32> -> vector<8x256xf32>
    %cst_4 = arith.constant dense<0.000000e+00> : vector<8xf32>
    %4 = vector.multi_reduction <add>, %3, %cst_4 [1] : vector<8x256xf32> to vector<8xf32>
    %5 = vector.shape_cast %4 : vector<8xf32> to vector<8x1xf32>
    %cst_5 = arith.constant 2.560000e+02 : f32
    %6 = vector.broadcast %cst_5 : f32 to vector<8x1xf32>
    %7 = arith.divf %5, %6 : vector<8x1xf32>
    %8 = vector.broadcast %7 : vector<8x1xf32> to vector<8x256xf32>
    %9 = arith.subf %3, %8 : vector<8x256xf32>
    %10 = vector.broadcast %7 : vector<8x1xf32> to vector<8x256xf32>
    %11 = arith.subf %3, %10 : vector<8x256xf32>
    %12 = arith.mulf %9, %11 : vector<8x256xf32>
    %cst_6 = arith.constant dense<0.000000e+00> : vector<8xf32>
    %13 = vector.multi_reduction <add>, %12, %cst_6 [1] : vector<8x256xf32> to vector<8xf32>
    %14 = vector.shape_cast %13 : vector<8xf32> to vector<8x1xf32>
    %cst_7 = arith.constant 2.560000e+02 : f32
    %15 = vector.broadcast %cst_7 : f32 to vector<8x1xf32>
    %16 = arith.divf %14, %15 : vector<8x1xf32>
    %17 = vector.broadcast %7 : vector<8x1xf32> to vector<8x256xf32>
    %18 = arith.subf %3, %17 : vector<8x256xf32>
    %cst_8 = arith.constant 9.99999974E-6 : f32
    %19 = vector.broadcast %cst_8 : f32 to vector<8x1xf32>
    %20 = arith.addf %16, %19 : vector<8x1xf32>
    %21 = math.rsqrt %20 : vector<8x1xf32>
    %22 = vector.broadcast %21 : vector<8x1xf32> to vector<8x256xf32>
    %23 = arith.mulf %18, %22 : vector<8x256xf32>
    %c0_9 = arith.constant 0 : index
    %c0_10 = arith.constant 0 : index
    %c0_11 = arith.constant 0 : index
    %24 = vector.load %arg2[%c0_9, %c0_10, %c0_11] : memref<2x4x256xf32, #tpu.memory_space<vmem>>, vector<1x4x256xf32>
    %25 = vector.shape_cast %24 : vector<1x4x256xf32> to vector<4x256xf32>
    %cst_12 = arith.constant dense<0.000000e+00> : vector<8x256xf32>
    %26 = tpu.matmul %0, %25, %cst_12 {dimension_numbers = #tpu.dot_dimension_numbers<[1], [0], [0], [1], [0, 0, 1, 1], [], []>} : vector<8x4xf32>, vector<4x256xf32>, vector<8x256xf32> -> vector<8x256xf32>
    %cst_13 = arith.constant dense<0.000000e+00> : vector<8xf32>
    %27 = vector.multi_reduction <add>, %26, %cst_13 [1] : vector<8x256xf32> to vector<8xf32>
    %28 = vector.shape_cast %27 : vector<8xf32> to vector<8x1xf32>
    %cst_14 = arith.constant 2.560000e+02 : f32
    %29 = vector.broadcast %cst_14 : f32 to vector<8x1xf32>
    %30 = arith.divf %28, %29 : vector<8x1xf32>
    %31 = vector.broadcast %30 : vector<8x1xf32> to vector<8x256xf32>
    %32 = arith.subf %26, %31 : vector<8x256xf32>
    %33 = vector.broadcast %30 : vector<8x1xf32> to vector<8x256xf32>
    %34 = arith.subf %26, %33 : vector<8x256xf32>
    %35 = arith.mulf %32, %34 : vector<8x256xf32>
    %cst_15 = arith.constant dense<0.000000e+00> : vector<8xf32>
    %36 = vector.multi_reduction <add>, %35, %cst_15 [1] : vector<8x256xf32> to vector<8xf32>
    %37 = vector.shape_cast %36 : vector<8xf32> to vector<8x1xf32>
    %cst_16 = arith.constant 2.560000e+02 : f32
    %38 = vector.broadcast %cst_16 : f32 to vector<8x1xf32>
    %39 = arith.divf %37, %38 : vector<8x1xf32>
    %40 = vector.broadcast %30 : vector<8x1xf32> to vector<8x256xf32>
    %41 = arith.subf %26, %40 : vector<8x256xf32>
    %cst_17 = arith.constant 9.99999974E-6 : f32
    %42 = vector.broadcast %cst_17 : f32 to vector<8x1xf32>
    %43 = arith.addf %39, %42 : vector<8x1xf32>
    %44 = math.rsqrt %43 : vector<8x1xf32>
    %45 = vector.broadcast %44 : vector<8x1xf32> to vector<8x256xf32>
    %46 = arith.mulf %41, %45 : vector<8x256xf32>
    %c0_18 = arith.constant 0 : index
    %c0_19 = arith.constant 0 : index
    %c0_20 = arith.constant 0 : index
    %47 = vector.load %arg3[%c0_18, %c0_19, %c0_20] : memref<2x4x256xf32, #tpu.memory_space<vmem>>, vector<1x4x256xf32>
    %48 = vector.shape_cast %47 : vector<1x4x256xf32> to vector<4x256xf32>
    %cst_21 = arith.constant dense<0.000000e+00> : vector<8x256xf32>
    %49 = tpu.matmul %0, %48, %cst_21 {dimension_numbers = #tpu.dot_dimension_numbers<[1], [0], [0], [1], [0, 0, 1, 1], [], []>} : vector<8x4xf32>, vector<4x256xf32>, vector<8x256xf32> -> vector<8x256xf32>
    %cst_22 = arith.constant dense<0.000000e+00> : vector<8xf32>
    %50 = vector.multi_reduction <add>, %49, %cst_22 [1] : vector<8x256xf32> to vector<8xf32>
    %51 = vector.shape_cast %50 : vector<8xf32> to vector<8x1xf32>
    %cst_23 = arith.constant 2.560000e+02 : f32
    %52 = vector.broadcast %cst_23 : f32 to vector<8x1xf32>
    %53 = arith.divf %51, %52 : vector<8x1xf32>
    %54 = vector.broadcast %53 : vector<8x1xf32> to vector<8x256xf32>
    %55 = arith.subf %49, %54 : vector<8x256xf32>
    %56 = vector.broadcast %53 : vector<8x1xf32> to vector<8x256xf32>
    %57 = arith.subf %49, %56 : vector<8x256xf32>
    %58 = arith.mulf %55, %57 : vector<8x256xf32>
    %cst_24 = arith.constant dense<0.000000e+00> : vector<8xf32>
    %59 = vector.multi_reduction <add>, %58, %cst_24 [1] : vector<8x256xf32> to vector<8xf32>
    %60 = vector.shape_cast %59 : vector<8xf32> to vector<8x1xf32>
    %cst_25 = arith.constant 2.560000e+02 : f32
    %61 = vector.broadcast %cst_25 : f32 to vector<8x1xf32>
    %62 = arith.divf %60, %61 : vector<8x1xf32>
    %63 = vector.broadcast %53 : vector<8x1xf32> to vector<8x256xf32>
    %64 = arith.subf %49, %63 : vector<8x256xf32>
    %cst_26 = arith.constant 9.99999974E-6 : f32
    %65 = vector.broadcast %cst_26 : f32 to vector<8x1xf32>
    %66 = arith.addf %62, %65 : vector<8x1xf32>
    %67 = math.rsqrt %66 : vector<8x1xf32>
    %68 = vector.broadcast %67 : vector<8x1xf32> to vector<8x256xf32>
    %69 = arith.mulf %64, %68 : vector<8x256xf32>
    %70 = arith.subf %23, %46 : vector<8x256xf32>
    %71 = arith.subf %23, %69 : vector<8x256xf32>
    %72 = arith.mulf %70, %70 : vector<8x256xf32>
    %cst_27 = arith.constant dense<0.000000e+00> : vector<256xf32>
    %73 = vector.multi_reduction <add>, %72, %cst_27 [0] : vector<8x256xf32> to vector<256xf32>
    %74 = vector.shape_cast %73 : vector<256xf32> to vector<1x256xf32>
    %c0_28 = arith.constant 0 : index
    %c0_29 = arith.constant 0 : index
    %c0_30 = arith.constant 0 : index
    %75 = vector.load %arg5[%c0_28, %c0_29, %c0_30] : memref<2x2x256xf32, #tpu.memory_space<vmem>>, vector<1x1x256xf32>
    %76 = vector.shape_cast %75 : vector<1x1x256xf32> to vector<1x256xf32>
    %77 = vector.shape_cast %74 : vector<1x256xf32> to vector<1x1x256xf32>
    tpu.vector_store %arg5[%c0_28, %c0_29, %c0_30], %77 {strides = array<i32>} : memref<2x2x256xf32, #tpu.memory_space<vmem>>, vector<1x1x256xf32>,
    %78 = arith.mulf %71, %71 : vector<8x256xf32>
    %cst_31 = arith.constant dense<0.000000e+00> : vector<256xf32>
    %79 = vector.multi_reduction <add>, %78, %cst_31 [0] : vector<8x256xf32> to vector<256xf32>
    %80 = vector.shape_cast %79 : vector<256xf32> to vector<1x256xf32>
    %c0_32 = arith.constant 0 : index
    %c1 = arith.constant 1 : index
    %c0_33 = arith.constant 0 : index
    %81 = vector.load %arg5[%c0_32, %c1, %c0_33] : memref<2x2x256xf32, #tpu.memory_space<vmem>>, vector<1x1x256xf32>
    %82 = vector.shape_cast %81 : vector<1x1x256xf32> to vector<1x256xf32>
    %83 = vector.shape_cast %80 : vector<1x256xf32> to vector<1x1x256xf32>
    tpu.vector_store %arg5[%c0_32, %c1, %c0_33], %83 {strides = array<i32>} : memref<2x2x256xf32, #tpu.memory_space<vmem>>, vector<1x1x256xf32>,
    %c1_34 = arith.constant 1 : index
    %c0_35 = arith.constant 0 : index
    %c0_36 = arith.constant 0 : index
    %84 = vector.load %arg1[%c1_34, %c0_35, %c0_36] : memref<2x4x256xf32, #tpu.memory_space<vmem>>, vector<1x4x256xf32>
    %85 = vector.shape_cast %84 : vector<1x4x256xf32> to vector<4x256xf32>
    %cst_37 = arith.constant dense<0.000000e+00> : vector<8x256xf32>
    %86 = tpu.matmul %0, %85, %cst_37 {dimension_numbers = #tpu.dot_dimension_numbers<[1], [0], [0], [1], [0, 0, 1, 1], [], []>} : vector<8x4xf32>, vector<4x256xf32>, vector<8x256xf32> -> vector<8x256xf32>
    %cst_38 = arith.constant dense<0.000000e+00> : vector<8xf32>
    %87 = vector.multi_reduction <add>, %86, %cst_38 [1] : vector<8x256xf32> to vector<8xf32>
    %88 = vector.shape_cast %87 : vector<8xf32> to vector<8x1xf32>
    %cst_39 = arith.constant 2.560000e+02 : f32
    %89 = vector.broadcast %cst_39 : f32 to vector<8x1xf32>
    %90 = arith.divf %88, %89 : vector<8x1xf32>
    %91 = vector.broadcast %90 : vector<8x1xf32> to vector<8x256xf32>
    %92 = arith.subf %86, %91 : vector<8x256xf32>
    %93 = vector.broadcast %90 : vector<8x1xf32> to vector<8x256xf32>
    %94 = arith.subf %86, %93 : vector<8x256xf32>
    %95 = arith.mulf %92, %94 : vector<8x256xf32>
    %cst_40 = arith.constant dense<0.000000e+00> : vector<8xf32>
    %96 = vector.multi_reduction <add>, %95, %cst_40 [1] : vector<8x256xf32> to vector<8xf32>
    %97 = vector.shape_cast %96 : vector<8xf32> to vector<8x1xf32>
    %cst_41 = arith.constant 2.560000e+02 : f32
    %98 = vector.broadcast %cst_41 : f32 to vector<8x1xf32>
    %99 = arith.divf %97, %98 : vector<8x1xf32>
    %100 = vector.broadcast %90 : vector<8x1xf32> to vector<8x256xf32>
    %101 = arith.subf %86, %100 : vector<8x256xf32>
    %cst_42 = arith.constant 9.99999974E-6 : f32
    %102 = vector.broadcast %cst_42 : f32 to vector<8x1xf32>
    %103 = arith.addf %99, %102 : vector<8x1xf32>
    %104 = math.rsqrt %103 : vector<8x1xf32>
    %105 = vector.broadcast %104 : vector<8x1xf32> to vector<8x256xf32>
    %106 = arith.mulf %101, %105 : vector<8x256xf32>
    %c1_43 = arith.constant 1 : index
    %c0_44 = arith.constant 0 : index
    %c0_45 = arith.constant 0 : index
    %107 = vector.load %arg2[%c1_43, %c0_44, %c0_45] : memref<2x4x256xf32, #tpu.memory_space<vmem>>, vector<1x4x256xf32>
    %108 = vector.shape_cast %107 : vector<1x4x256xf32> to vector<4x256xf32>
    %cst_46 = arith.constant dense<0.000000e+00> : vector<8x256xf32>
    %109 = tpu.matmul %0, %108, %cst_46 {dimension_numbers = #tpu.dot_dimension_numbers<[1], [0], [0], [1], [0, 0, 1, 1], [], []>} : vector<8x4xf32>, vector<4x256xf32>, vector<8x256xf32> -> vector<8x256xf32>
    %cst_47 = arith.constant dense<0.000000e+00> : vector<8xf32>
    %110 = vector.multi_reduction <add>, %109, %cst_47 [1] : vector<8x256xf32> to vector<8xf32>
    %111 = vector.shape_cast %110 : vector<8xf32> to vector<8x1xf32>
    %cst_48 = arith.constant 2.560000e+02 : f32
    %112 = vector.broadcast %cst_48 : f32 to vector<8x1xf32>
    %113 = arith.divf %111, %112 : vector<8x1xf32>
    %114 = vector.broadcast %113 : vector<8x1xf32> to vector<8x256xf32>
    %115 = arith.subf %109, %114 : vector<8x256xf32>
    %116 = vector.broadcast %113 : vector<8x1xf32> to vector<8x256xf32>
    %117 = arith.subf %109, %116 : vector<8x256xf32>
    %118 = arith.mulf %115, %117 : vector<8x256xf32>
    %cst_49 = arith.constant dense<0.000000e+00> : vector<8xf32>
    %119 = vector.multi_reduction <add>, %118, %cst_49 [1] : vector<8x256xf32> to vector<8xf32>
    %120 = vector.shape_cast %119 : vector<8xf32> to vector<8x1xf32>
    %cst_50 = arith.constant 2.560000e+02 : f32
    %121 = vector.broadcast %cst_50 : f32 to vector<8x1xf32>
    %122 = arith.divf %120, %121 : vector<8x1xf32>
    %123 = vector.broadcast %113 : vector<8x1xf32> to vector<8x256xf32>
    %124 = arith.subf %109, %123 : vector<8x256xf32>
    %cst_51 = arith.constant 9.99999974E-6 : f32
    %125 = vector.broadcast %cst_51 : f32 to vector<8x1xf32>
    %126 = arith.addf %122, %125 : vector<8x1xf32>
    %127 = math.rsqrt %126 : vector<8x1xf32>
    %128 = vector.broadcast %127 : vector<8x1xf32> to vector<8x256xf32>
    %129 = arith.mulf %124, %128 : vector<8x256xf32>
    %c1_52 = arith.constant 1 : index
    %c0_53 = arith.constant 0 : index
    %c0_54 = arith.constant 0 : index
    %130 = vector.load %arg3[%c1_52, %c0_53, %c0_54] : memref<2x4x256xf32, #tpu.memory_space<vmem>>, vector<1x4x256xf32>
    %131 = vector.shape_cast %130 : vector<1x4x256xf32> to vector<4x256xf32>
    %cst_55 = arith.constant dense<0.000000e+00> : vector<8x256xf32>
    %132 = tpu.matmul %0, %131, %cst_55 {dimension_numbers = #tpu.dot_dimension_numbers<[1], [0], [0], [1], [0, 0, 1, 1], [], []>} : vector<8x4xf32>, vector<4x256xf32>, vector<8x256xf32> -> vector<8x256xf32>
    %cst_56 = arith.constant dense<0.000000e+00> : vector<8xf32>
    %133 = vector.multi_reduction <add>, %132, %cst_56 [1] : vector<8x256xf32> to vector<8xf32>
    %134 = vector.shape_cast %133 : vector<8xf32> to vector<8x1xf32>
    %cst_57 = arith.constant 2.560000e+02 : f32
    %135 = vector.broadcast %cst_57 : f32 to vector<8x1xf32>
    %136 = arith.divf %134, %135 : vector<8x1xf32>
    %137 = vector.broadcast %136 : vector<8x1xf32> to vector<8x256xf32>
    %138 = arith.subf %132, %137 : vector<8x256xf32>
    %139 = vector.broadcast %136 : vector<8x1xf32> to vector<8x256xf32>
    %140 = arith.subf %132, %139 : vector<8x256xf32>
    %141 = arith.mulf %138, %140 : vector<8x256xf32>
    %cst_58 = arith.constant dense<0.000000e+00> : vector<8xf32>
    %142 = vector.multi_reduction <add>, %141, %cst_58 [1] : vector<8x256xf32> to vector<8xf32>
    %143 = vector.shape_cast %142 : vector<8xf32> to vector<8x1xf32>
    %cst_59 = arith.constant 2.560000e+02 : f32
    %144 = vector.broadcast %cst_59 : f32 to vector<8x1xf32>
    %145 = arith.divf %143, %144 : vector<8x1xf32>
    %146 = vector.broadcast %136 : vector<8x1xf32> to vector<8x256xf32>
    %147 = arith.subf %132, %146 : vector<8x256xf32>
    %cst_60 = arith.constant 9.99999974E-6 : f32
    %148 = vector.broadcast %cst_60 : f32 to vector<8x1xf32>
    %149 = arith.addf %145, %148 : vector<8x1xf32>
    %150 = math.rsqrt %149 : vector<8x1xf32>
    %151 = vector.broadcast %150 : vector<8x1xf32> to vector<8x256xf32>
    %152 = arith.mulf %147, %151 : vector<8x256xf32>
    %153 = arith.subf %106, %129 : vector<8x256xf32>
    %154 = arith.subf %106, %152 : vector<8x256xf32>
    %155 = arith.mulf %153, %153 : vector<8x256xf32>
    %cst_61 = arith.constant dense<0.000000e+00> : vector<256xf32>
    %156 = vector.multi_reduction <add>, %155, %cst_61 [0] : vector<8x256xf32> to vector<256xf32>
    %157 = vector.shape_cast %156 : vector<256xf32> to vector<1x256xf32>
    %c1_62 = arith.constant 1 : index
    %c0_63 = arith.constant 0 : index
    %c0_64 = arith.constant 0 : index
    %158 = vector.load %arg5[%c1_62, %c0_63, %c0_64] : memref<2x2x256xf32, #tpu.memory_space<vmem>>, vector<1x1x256xf32>
    %159 = vector.shape_cast %158 : vector<1x1x256xf32> to vector<1x256xf32>
    %160 = vector.shape_cast %157 : vector<1x256xf32> to vector<1x1x256xf32>
    tpu.vector_store %arg5[%c1_62, %c0_63, %c0_64], %160 {strides = array<i32>} : memref<2x2x256xf32, #tpu.memory_space<vmem>>, vector<1x1x256xf32>,
    %161 = arith.mulf %154, %154 : vector<8x256xf32>
    %cst_65 = arith.constant dense<0.000000e+00> : vector<256xf32>
    %162 = vector.multi_reduction <add>, %161, %cst_65 [0] : vector<8x256xf32> to vector<256xf32>
    %163 = vector.shape_cast %162 : vector<256xf32> to vector<1x256xf32>
    %c1_66 = arith.constant 1 : index
    %c1_67 = arith.constant 1 : index
    %c0_68 = arith.constant 0 : index
    %164 = vector.load %arg5[%c1_66, %c1_67, %c0_68] : memref<2x2x256xf32, #tpu.memory_space<vmem>>, vector<1x1x256xf32>
    %165 = vector.shape_cast %164 : vector<1x1x256xf32> to vector<1x256xf32>
    %166 = vector.shape_cast %163 : vector<1x256xf32> to vector<1x1x256xf32>
    tpu.vector_store %arg5[%c1_66, %c1_67, %c0_68], %166 {strides = array<i32>} : memref<2x2x256xf32, #tpu.memory_space<vmem>>, vector<1x1x256xf32>,
    return
  }
  func.func @transform_0(%arg0: i32) -> (i32, i32, i32) {
    %c0_i32 = arith.constant 0 : i32
    %c0_i32_0 = arith.constant 0 : i32
    %c0_i32_1 = arith.constant 0 : i32
    %c0_i32_2 = arith.constant 0 : i32
    return %c0_i32, %c0_i32_0, %c0_i32_1 : i32, i32, i32
  }
  func.func @transform_1(%arg0: i32) -> (i32, i32, i32) {
    %c0_i32 = arith.constant 0 : i32
    %c0_i32_0 = arith.constant 0 : i32
    %c0_i32_1 = arith.constant 0 : i32
    %c0_i32_2 = arith.constant 0 : i32
    return %c0_i32, %c0_i32_0, %c0_i32_1 : i32, i32, i32
  }
  func.func @transform_2(%arg0: i32) -> (i32, i32, i32) {
    %c0_i32 = arith.constant 0 : i32
    %c0_i32_0 = arith.constant 0 : i32
    %c0_i32_1 = arith.constant 0 : i32
    %c0_i32_2 = arith.constant 0 : i32
    return %c0_i32, %c0_i32_0, %c0_i32_1 : i32, i32, i32
  }
  func.func @transform_3(%arg0: i32) -> (i32, i32) {
    %c0_i32 = arith.constant 0 : i32
    %c0_i32_0 = arith.constant 0 : i32
    %c0_i32_1 = arith.constant 0 : i32
    return %c0_i32, %c0_i32_0 : i32, i32
  }
  func.func @transform_4(%arg0: i32) -> (i32, i32, i32) {
    %c0_i32 = arith.constant 0 : i32
    %c0_i32_0 = arith.constant 0 : i32
    %c0_i32_1 = arith.constant 0 : i32
    %c0_i32_2 = arith.constant 0 : i32
    return %c0_i32, %c0_i32_0, %c0_i32_1 : i32, i32, i32
  }
}

</mosaic_0001>

<llo_original>
// kernel: tpu_custom_call.1
$region0: #{tpu_custom_call.1}
  #allocation0 [shape = 'u32[]', space=smem, size = 0x4, offset = 0x4, fixed_abs, tag = 'smem constant byte address 0x4 - core index']
  #allocation1 [shape = 'u32[144,128]{1,0:T(1,128)}', space=vmem, size = 0x12000, scoped, tag = 'internal scratch']
  %s0 = inlined_call_operand.hbm [shape: f32[2,4,256], index: 0, kind: input, shape index: {}]
  %s1 = inlined_call_operand.hbm [shape: f32[2,4,256], index: 1, kind: input, shape index: {}]
  %s2 = inlined_call_operand.vmem [shape: f32[2,4,256], index: 2, kind: input, shape index: {}]
  %s3 = inlined_call_operand.vmem [shape: f32[8,4], index: 3, kind: input, shape index: {}]
  %s4 = inlined_call_operand.hbm [shape: f32[2,2,256], index: 4, kind: output, shape index: {}]
  %s5 = sld [smem:[#allocation0]]
  $region34: #{tpu_custom_call.1} parent=0
    _
  %s7 = ssub.s32 1, %s5
  %s8 = scalar_select 0, %s7, %s5
  $region1: #{tpu_custom_call.1} parent=0
    #allocation2 [shape = 'u8[8192]{0}', space=vmem, size = 0x2000, scoped, tag = 'input window, operand 0, single buffered']
    #allocation3 [shape = 's32[1]{0}', space=sflag, size = 0x4, scoped, tag = 'scoped memory for tpu_custom_call.1']
    #allocation4 [shape = 's32[1]{0}', space=sflag, size = 0x4, scoped, tag = 'scoped memory for tpu_custom_call.1']
    #allocation5 [shape = 'u8[8192]{0}', space=vmem, size = 0x2000, scoped, tag = 'input window, operand 1, single buffered']
    #allocation6 [shape = 's32[1]{0}', space=sflag, size = 0x4, scoped, tag = 'scoped memory for tpu_custom_call.1']
    #allocation7 [shape = 'u8[4096]{0}', space=vmem, size = 0x1000, scoped, tag = 'output window, operand 0, single buffered']
    %9 = vsyncpa [#allocation3], 0
    %10 = vsyncpa [#allocation6], 0
    %11 = vsyncpa [#allocation4], 0
    // Predicated region
    $region2: #{tpu_custom_call.1} parent=1 // pred_check
      _
    $region3: #{tpu_custom_call.1} parent=1 // pred_check_branch
      %13 = sbr.rel (0) target = $region5
    $region4: #{tpu_custom_call.1} parent=1 // pred_region
      %s15 = ssub.s32 256, 256
      %16 = vsyncadd [#allocation3], %s15
      %s17 = sshll.u32 [#allocation2], 4
      %s18 = int_to_ptr.vmem [resolvable:$true] %s17
      %23 = dma.hbm_to_vmem [thread:$0]  %s0, 256, %s18, [#allocation3], 128, 128, 8
    $region5: #{tpu_custom_call.1} parent=1 // pred_fallthru
      _
    // Predicated region
    $region6: #{tpu_custom_call.1} parent=1 // pred_check
      _
    $region7: #{tpu_custom_call.1} parent=1 // pred_check_branch
      %25 = sbr.rel (0) target = $region9
    $region8: #{tpu_custom_call.1} parent=1 // pred_region
      %s27 = ssub.s32 256, 256
      %28 = vsyncadd [#allocation6], %s27
      %s29 = sshll.u32 [#allocation5], 4
      %s30 = int_to_ptr.vmem [resolvable:$true] %s29
      %35 = dma.hbm_to_vmem [thread:$0]  %s1, 256, %s30, [#allocation6], 128, 128, 8
    $region9: #{tpu_custom_call.1} parent=1 // pred_fallthru
      _
    // Predicated region
    $region10: #{tpu_custom_call.1} parent=1 // pred_check
      _
    $region11: #{tpu_custom_call.1} parent=1 // pred_check_branch
      %37 = sbr.rel (0) target = $region13
    $region12: #{tpu_custom_call.1} parent=1 // pred_region
      _
    $region13: #{tpu_custom_call.1} parent=1 // pred_fallthru
      _
    // Predicated region
    $region14: #{tpu_custom_call.1} parent=1 // pred_check
      _
    $region15: #{tpu_custom_call.1} parent=1 // pred_check_branch
      %39 = sbr.rel (0) target = $region17
    $region16: #{tpu_custom_call.1} parent=1 // pred_region
      _
    $region17: #{tpu_custom_call.1} parent=1 // pred_fallthru
      _
    // Predicated region
    $region18: #{tpu_custom_call.1} parent=1 // pred_check
      _
    $region19: #{tpu_custom_call.1} parent=1 // pred_check_branch
      %41 = sbr.rel (0) target = $region21
    $region20: #{tpu_custom_call.1} parent=1 // pred_region
      %42 = dma.done [#allocation3], 256
    $region21: #{tpu_custom_call.1} parent=1 // pred_fallthru
      _
    // Predicated region
    $region22: #{tpu_custom_call.1} parent=1 // pred_check
      _
    $region23: #{tpu_custom_call.1} parent=1 // pred_check_branch
      %44 = sbr.rel (0) target = $region25
    $region24: #{tpu_custom_call.1} parent=1 // pred_region
      %45 = dma.done [#allocation6], 256
    $region25: #{tpu_custom_call.1} parent=1 // pred_fallthru
      _
    %v46 = vld [vmem:[%s3] sm:$0xff]
    %v47 = vld [vmem:[#allocation2] sm:$0xff]
    %v49 = vcombine.high %v47, %v47
    %vm50 = vcmask 31744
    %v52 = vsel %vm50, %v46, 0
    %vm54 = vcmask 1043456
    %v55 = vsel %vm54, %v47, 0
    %v57 = vsel %vm54, %v49, 0
    %59 = vmatprep.subr.mxu0 %v57
    %60 = vmatpush1.msra.mxu0 %v55
    %61 = vmatprep.subr.mxu0 0.0
    %62 = vmatpush1.msra.mxu0 0.0
    %63 = vmatprep.subr.mxu0 0.0
    %64 = vmatpush1.msra.mxu0 0.0
    %65 = vmatprep.subr.mxu0 0.0
    %66 = vmatpush1.msra.mxu0 0.0
    %67 = vmatprep.subr.mxu0 0.0
    %68 = vmatpush1.msra.mxu0 0.0
    %69 = vmatprep.subr.mxu0 0.0
    %70 = vmatpush1.msra.mxu0 0.0
    %71 = vmatprep.subr.mxu0 0.0
    %72 = vmatpush1.msra.mxu0 0.0
    %73 = vmatprep.subr.mxu0 0.0
    %74 = vmatpush1.msra.mxu0 0.0
    %75 = vmatprep.subr.mxu0 0.0
    %76 = vmatpush1.msra.mxu0 0.0
    %77 = vmatprep.subr.mxu0 0.0
    %78 = vmatpush1.msra.mxu0 0.0
    %79 = vmatprep.subr.mxu0 0.0
    %80 = vmatpush1.msra.mxu0 0.0
    %81 = vmatprep.subr.mxu0 0.0
    %82 = vmatpush1.msra.mxu0 0.0
    %83 = vmatprep.subr.mxu0 0.0
    %84 = vmatpush1.msra.mxu0 0.0
    %85 = vmatprep.subr.mxu0 0.0
    %86 = vmatpush1.msra.mxu0 0.0
    %87 = vmatprep.subr.mxu0 0.0
    %88 = vmatpush1.msra.mxu0 0.0
    %89 = vmatprep.subr.mxu0 0.0
    %90 = vmatpush1.msra.mxu0 0.0
    %91 = vmatprep.subr.mxu0 0.0
    %92 = vmatpush1.msra.mxu0 0.0
    %93 = vmatprep.subr.mxu0 0.0
    %94 = vmatpush1.msra.mxu0 0.0
    %95 = vmatprep.subr.mxu0 0.0
    %96 = vmatpush1.msra.mxu0 0.0
    %97 = vmatprep.subr.mxu0 0.0
    %98 = vmatpush1.msra.mxu0 0.0
    %99 = vmatprep.subr.mxu0 0.0
    %100 = vmatpush1.msra.mxu0 0.0
    %101 = vmatprep.subr.mxu0 0.0
    %102 = vmatpush1.msra.mxu0 0.0
    %103 = vmatprep.subr.mxu0 0.0
    %104 = vmatpush1.msra.mxu0 0.0
    %105 = vmatprep.subr.mxu0 0.0
    %106 = vmatpush1.msra.mxu0 0.0
    %107 = vmatprep.subr.mxu0 0.0
    %108 = vmatpush1.msra.mxu0 0.0
    %109 = vmatprep.subr.mxu0 0.0
    %110 = vmatpush1.msra.mxu0 0.0
    %111 = vmatprep.subr.mxu0 0.0
    %112 = vmatpush1.msra.mxu0 0.0
    %113 = vmatprep.subr.mxu0 0.0
    %114 = vmatpush1.msra.mxu0 0.0
    %115 = vmatprep.subr.mxu0 0.0
    %116 = vmatpush1.msra.mxu0 0.0
    %117 = vmatprep.subr.mxu0 0.0
    %118 = vmatpush1.msra.mxu0 0.0
    %119 = vmatprep.subr.mxu0 0.0
    %120 = vmatpush1.msra.mxu0 0.0
    %121 = vmatprep.subr.mxu0 0.0
    %122 = vmatpush1.msra.mxu0 0.0
    %123 = vmatprep.mubr.f32.mxu0 0.0
    %124 = vmatmul.mubr.f32.gmra.mrb[0].mxu0 %v52
    %v125 = vpop.f32.mrb[0].mxu0
    %v126 = vadd.f32 0.0, %v125
    %v127 = vpop.f32.mrb[0].mxu0
    %v128 = vadd.f32 0.0, %v127
    %129 = vdwg.mxu0
    %v130 = vadd.f32 %v126, %v128
    %131 = vadd.xlane.f32.xlu0 %v130
    %v132 = vpop.xlane.xlu0 %131
    %v133 = vrcp.pop 256.0
    %v134 = vmul.f32 %v132, %v133
    %v135 = vsub.f32 %v126, %v134
    %v136 = vsub.f32 %v128, %v134
    %v137 = vmul.f32 %v135, %v135
    %v138 = vmul.f32 %v136, %v136
    %v139 = vadd.f32 %v137, %v138
    %140 = vadd.xlane.f32.xlu0 %v139
    %v141 = vpop.xlane.xlu0 %140
    %v142 = vmul.f32 %v141, %v133
    %v143 = vadd.f32 %v142, 1e-05
    %v144 = vrsqrt.pop %v143
    %v145 = vmul.f32 %v135, %v144
    %v146 = vmul.f32 %v136, %v144
    %v147 = vld [vmem:[#allocation5] sm:$0xff]
    %v149 = vcombine.high %v147, %v147
    %v150 = vsel %vm54, %v147, 0
    %v152 = vsel %vm54, %v149, 0
    %154 = vmatprep.subr.mxu0 %v152
    %155 = vmatpush1.msra.mxu0 %v150
    %156 = vmatprep.subr.mxu0 0.0
    %157 = vmatpush1.msra.mxu0 0.0
    %158 = vmatprep.subr.mxu0 0.0
    %159 = vmatpush1.msra.mxu0 0.0
    %160 = vmatprep.subr.mxu0 0.0
    %161 = vmatpush1.msra.mxu0 0.0
    %162 = vmatprep.subr.mxu0 0.0
    %163 = vmatpush1.msra.mxu0 0.0
    %164 = vmatprep.subr.mxu0 0.0
    %165 = vmatpush1.msra.mxu0 0.0
    %166 = vmatprep.subr.mxu0 0.0
    %167 = vmatpush1.msra.mxu0 0.0
    %168 = vmatprep.subr.mxu0 0.0
    %169 = vmatpush1.msra.mxu0 0.0
    %170 = vmatprep.subr.mxu0 0.0
    %171 = vmatpush1.msra.mxu0 0.0
    %172 = vmatprep.subr.mxu0 0.0
    %173 = vmatpush1.msra.mxu0 0.0
    %174 = vmatprep.subr.mxu0 0.0
    %175 = vmatpush1.msra.mxu0 0.0
    %176 = vmatprep.subr.mxu0 0.0
    %177 = vmatpush1.msra.mxu0 0.0
    %178 = vmatprep.subr.mxu0 0.0
    %179 = vmatpush1.msra.mxu0 0.0
    %180 = vmatprep.subr.mxu0 0.0
    %181 = vmatpush1.msra.mxu0 0.0
    %182 = vmatprep.subr.mxu0 0.0
    %183 = vmatpush1.msra.mxu0 0.0
    %184 = vmatprep.subr.mxu0 0.0
    %185 = vmatpush1.msra.mxu0 0.0
    %186 = vmatprep.subr.mxu0 0.0
    %187 = vmatpush1.msra.mxu0 0.0
    %188 = vmatprep.subr.mxu0 0.0
    %189 = vmatpush1.msra.mxu0 0.0
    %190 = vmatprep.subr.mxu0 0.0
    %191 = vmatpush1.msra.mxu0 0.0
    %192 = vmatprep.subr.mxu0 0.0
    %193 = vmatpush1.msra.mxu0 0.0
    %194 = vmatprep.subr.mxu0 0.0
    %195 = vmatpush1.msra.mxu0 0.0
    %196 = vmatprep.subr.mxu0 0.0
    %197 = vmatpush1.msra.mxu0 0.0
    %198 = vmatprep.subr.mxu0 0.0
    %199 = vmatpush1.msra.mxu0 0.0
    %200 = vmatprep.subr.mxu0 0.0
    %201 = vmatpush1.msra.mxu0 0.0
    %202 = vmatprep.subr.mxu0 0.0
    %203 = vmatpush1.msra.mxu0 0.0
    %204 = vmatprep.subr.mxu0 0.0
    %205 = vmatpush1.msra.mxu0 0.0
    %206 = vmatprep.subr.mxu0 0.0
    %207 = vmatpush1.msra.mxu0 0.0
    %208 = vmatprep.subr.mxu0 0.0
    %209 = vmatpush1.msra.mxu0 0.0
    %210 = vmatprep.subr.mxu0 0.0
    %211 = vmatpush1.msra.mxu0 0.0
    %212 = vmatprep.subr.mxu0 0.0
    %213 = vmatpush1.msra.mxu0 0.0
    %214 = vmatprep.subr.mxu0 0.0
    %215 = vmatpush1.msra.mxu0 0.0
    %216 = vmatprep.subr.mxu0 0.0
    %217 = vmatpush1.msra.mxu0 0.0
    %218 = vmatprep.mubr.f32.mxu0 0.0
    %219 = vmatmul.mubr.f32.gmra.mrb[0].mxu0 %v52
    %v220 = vpop.f32.mrb[0].mxu0
    %v221 = vadd.f32 0.0, %v220
    %v222 = vpop.f32.mrb[0].mxu0
    %v223 = vadd.f32 0.0, %v222
    %224 = vdwg.mxu0
    %v225 = vadd.f32 %v221, %v223
    %226 = vadd.xlane.f32.xlu0 %v225
    %v227 = vpop.xlane.xlu0 %226
    %v228 = vmul.f32 %v227, %v133
    %v229 = vsub.f32 %v221, %v228
    %v230 = vsub.f32 %v223, %v228
    %v231 = vmul.f32 %v229, %v229
    %v232 = vmul.f32 %v230, %v230
    %v233 = vadd.f32 %v231, %v232
    %234 = vadd.xlane.f32.xlu0 %v233
    %v235 = vpop.xlane.xlu0 %234
    %v236 = vmul.f32 %v235, %v133
    %v237 = vadd.f32 %v236, 1e-05
    %v238 = vrsqrt.pop %v237
    %v239 = vmul.f32 %v229, %v238
    %v240 = vmul.f32 %v230, %v238
    %v241 = vld [vmem:[%s2] sm:$0xff]
    %v243 = vcombine.high %v241, %v241
    %v244 = vsel %vm54, %v241, 0
    %v246 = vsel %vm54, %v243, 0
    %248 = vmatprep.subr.mxu0 %v246
    %249 = vmatpush1.msra.mxu0 %v244
    %250 = vmatprep.subr.mxu0 0.0
    %251 = vmatpush1.msra.mxu0 0.0
    %252 = vmatprep.subr.mxu0 0.0
    %253 = vmatpush1.msra.mxu0 0.0
    %254 = vmatprep.subr.mxu0 0.0
    %255 = vmatpush1.msra.mxu0 0.0
    %256 = vmatprep.subr.mxu0 0.0
    %257 = vmatpush1.msra.mxu0 0.0
    %258 = vmatprep.subr.mxu0 0.0
    %259 = vmatpush1.msra.mxu0 0.0
    %260 = vmatprep.subr.mxu0 0.0
    %261 = vmatpush1.msra.mxu0 0.0
    %262 = vmatprep.subr.mxu0 0.0
    %263 = vmatpush1.msra.mxu0 0.0
    %264 = vmatprep.subr.mxu0 0.0
    %265 = vmatpush1.msra.mxu0 0.0
    %266 = vmatprep.subr.mxu0 0.0
    %267 = vmatpush1.msra.mxu0 0.0
    %268 = vmatprep.subr.mxu0 0.0
    %269 = vmatpush1.msra.mxu0 0.0
    %270 = vmatprep.subr.mxu0 0.0
    %271 = vmatpush1.msra.mxu0 0.0
    %272 = vmatprep.subr.mxu0 0.0
    %273 = vmatpush1.msra.mxu0 0.0
    %274 = vmatprep.subr.mxu0 0.0
    %275 = vmatpush1.msra.mxu0 0.0
    %276 = vmatprep.subr.mxu0 0.0
    %277 = vmatpush1.msra.mxu0 0.0
    %278 = vmatprep.subr.mxu0 0.0
    %279 = vmatpush1.msra.mxu0 0.0
    %280 = vmatprep.subr.mxu0 0.0
    %281 = vmatpush1.msra.mxu0 0.0
    %282 = vmatprep.subr.mxu0 0.0
    %283 = vmatpush1.msra.mxu0 0.0
    %284 = vmatprep.subr.mxu0 0.0
    %285 = vmatpush1.msra.mxu0 0.0
    %286 = vmatprep.subr.mxu0 0.0
    %287 = vmatpush1.msra.mxu0 0.0
    %288 = vmatprep.subr.mxu0 0.0
    %289 = vmatpush1.msra.mxu0 0.0
    %290 = vmatprep.subr.mxu0 0.0
    %291 = vmatpush1.msra.mxu0 0.0
    %292 = vmatprep.subr.mxu0 0.0
    %293 = vmatpush1.msra.mxu0 0.0
    %294 = vmatprep.subr.mxu0 0.0
    %295 = vmatpush1.msra.mxu0 0.0
    %296 = vmatprep.subr.mxu0 0.0
    %297 = vmatpush1.msra.mxu0 0.0
    %298 = vmatprep.subr.mxu0 0.0
    %299 = vmatpush1.msra.mxu0 0.0
    %300 = vmatprep.subr.mxu0 0.0
    %301 = vmatpush1.msra.mxu0 0.0
    %302 = vmatprep.subr.mxu0 0.0
    %303 = vmatpush1.msra.mxu0 0.0
    %304 = vmatprep.subr.mxu0 0.0
    %305 = vmatpush1.msra.mxu0 0.0
    %306 = vmatprep.subr.mxu0 0.0
    %307 = vmatpush1.msra.mxu0 0.0
    %308 = vmatprep.subr.mxu0 0.0
    %309 = vmatpush1.msra.mxu0 0.0
    %310 = vmatprep.subr.mxu0 0.0
    %311 = vmatpush1.msra.mxu0 0.0
    %312 = vmatprep.mubr.f32.mxu0 0.0
    %313 = vmatmul.mubr.f32.gmra.mrb[0].mxu0 %v52
    %v314 = vpop.f32.mrb[0].mxu0
    %v315 = vadd.f32 0.0, %v314
    %v316 = vpop.f32.mrb[0].mxu0
    %v317 = vadd.f32 0.0, %v316
    %318 = vdwg.mxu0
    %v319 = vadd.f32 %v315, %v317
    %320 = vadd.xlane.f32.xlu0 %v319
    %v321 = vpop.xlane.xlu0 %320
    %v322 = vmul.f32 %v321, %v133
    %v323 = vsub.f32 %v315, %v322
    %v324 = vsub.f32 %v317, %v322
    %v325 = vmul.f32 %v323, %v323
    %v326 = vmul.f32 %v324, %v324
    %v327 = vadd.f32 %v325, %v326
    %328 = vadd.xlane.f32.xlu0 %v327
    %v329 = vpop.xlane.xlu0 %328
    %v330 = vmul.f32 %v329, %v133
    %v331 = vadd.f32 %v330, 1e-05
    %v332 = vrsqrt.pop %v331
    %v333 = vmul.f32 %v323, %v332
    %v334 = vmul.f32 %v324, %v332
    %v335 = vsub.f32 %v145, %v239
    %v336 = vsub.f32 %v146, %v240
    %v337 = vsub.f32 %v145, %v333
    %v338 = vsub.f32 %v146, %v334
    %v339 = vmul.f32 %v335, %v335
    %v340 = vmul.f32 %v336, %v336
    %v341 = vrot.slane %v339, 4
    %v342 = vadd.f32 %v339, %v341
    %v343 = vrot.slane %v342, 2
    %v344 = vadd.f32 %v342, %v343
    %v345 = vrot.slane %v344, 1
    %v346 = vadd.f32 %v344, %v345
    %v347 = vrot.slane %v340, 4
    %v348 = vadd.f32 %v340, %v347
    %v349 = vrot.slane %v348, 2
    %v350 = vadd.f32 %v348, %v349
    %v351 = vrot.slane %v350, 1
    %v352 = vadd.f32 %v350, %v351
    %v355 = vcombine.low %v346, %v352
    %v357 = vunpack.c.l.s4 1966171168
    %v358 = vunpack.c.0.s8 %v357
    %v359 = vlaneseq
    %v360 = vshrl.u32 %v359, 7
    %v361 = vsub.s32 %v358, %v360
    %v362 = vrot.slane %v355, %v361
    %v364 = vunpack.c.l.s4 1966171168
    %v365 = vunpack.c.0.s8 %v364
    %v366 = vlaneseq
    %v367 = vshrl.u32 %v366, 7
    %v368 = vsub.s32 %v365, %v367
    %v369 = vrot.slane %v362, %v368
    %v371 = vlaneseq
    %vm372 = vcmp.ge.s32.totalorder %v371, 0
    %vm373 = vcmp.lt.s32.totalorder %v371, 256
    %vm374 = vmand %vm372, %vm373
    %375 = vst.msk [vmem:[#allocation7] ss:$2 sm:$0x3] %vm374, %v369
    %v376 = vmul.f32 %v337, %v337
    %v377 = vmul.f32 %v338, %v338
    %v378 = vrot.slane %v376, 4
    %v379 = vadd.f32 %v376, %v378
    %v380 = vrot.slane %v379, 2
    %v381 = vadd.f32 %v379, %v380
    %v382 = vrot.slane %v381, 1
    %v383 = vadd.f32 %v381, %v382
    %v384 = vrot.slane %v377, 4
    %v385 = vadd.f32 %v377, %v384
    %v386 = vrot.slane %v385, 2
    %v387 = vadd.f32 %v385, %v386
    %v388 = vrot.slane %v387, 1
    %v389 = vadd.f32 %v387, %v388
    %v392 = vcombine.low %v383, %v389
    %v394 = vunpack.c.l.s4 1966171168
    %v395 = vunpack.c.0.s8 %v394
    %v396 = vlaneseq
    %v397 = vshrl.u32 %v396, 7
    %v398 = vsub.s32 %v395, %v397
    %v399 = vrot.slane %v392, %v398
    %v401 = vunpack.c.l.s4 1966171168
    %v402 = vunpack.c.0.s8 %v401
    %v403 = vlaneseq
    %v404 = vshrl.u32 %v403, 7
    %v405 = vsub.s32 %v402, %v404
    %v406 = vrot.slane %v399, %v405
    %s408 = scalar_lea.vmem [#allocation7], 1
    %409 = vst.msk [vmem:[%s408] ss:$2 sm:$0x3] %vm374, %v406
    %s410 = scalar_lea.vmem [#allocation2], 8
    %v411 = vld [vmem:[%s410] sm:$0xff]
    %v413 = vcombine.high %v411, %v411
    %v414 = vsel %vm54, %v411, 0
    %v416 = vsel %vm54, %v413, 0
    %418 = vmatprep.subr.mxu0 %v416
    %419 = vmatpush1.msra.mxu0 %v414
    %420 = vmatprep.subr.mxu0 0.0
    %421 = vmatpush1.msra.mxu0 0.0
    %422 = vmatprep.subr.mxu0 0.0
    %423 = vmatpush1.msra.mxu0 0.0
    %424 = vmatprep.subr.mxu0 0.0
    %425 = vmatpush1.msra.mxu0 0.0
    %426 = vmatprep.subr.mxu0 0.0
    %427 = vmatpush1.msra.mxu0 0.0
    %428 = vmatprep.subr.mxu0 0.0
    %429 = vmatpush1.msra.mxu0 0.0
    %430 = vmatprep.subr.mxu0 0.0
    %431 = vmatpush1.msra.mxu0 0.0
    %432 = vmatprep.subr.mxu0 0.0
    %433 = vmatpush1.msra.mxu0 0.0
    %434 = vmatprep.subr.mxu0 0.0
    %435 = vmatpush1.msra.mxu0 0.0
    %436 = vmatprep.subr.mxu0 0.0
    %437 = vmatpush1.msra.mxu0 0.0
    %438 = vmatprep.subr.mxu0 0.0
    %439 = vmatpush1.msra.mxu0 0.0
    %440 = vmatprep.subr.mxu0 0.0
    %441 = vmatpush1.msra.mxu0 0.0
    %442 = vmatprep.subr.mxu0 0.0
    %443 = vmatpush1.msra.mxu0 0.0
    %444 = vmatprep.subr.mxu0 0.0
    %445 = vmatpush1.msra.mxu0 0.0
    %446 = vmatprep.subr.mxu0 0.0
    %447 = vmatpush1.msra.mxu0 0.0
    %448 = vmatprep.subr.mxu0 0.0
    %449 = vmatpush1.msra.mxu0 0.0
    %450 = vmatprep.subr.mxu0 0.0
    %451 = vmatpush1.msra.mxu0 0.0
    %452 = vmatprep.subr.mxu0 0.0
    %453 = vmatpush1.msra.mxu0 0.0
    %454 = vmatprep.subr.mxu0 0.0
    %455 = vmatpush1.msra.mxu0 0.0
    %456 = vmatprep.subr.mxu0 0.0
    %457 = vmatpush1.msra.mxu0 0.0
    %458 = vmatprep.subr.mxu0 0.0
    %459 = vmatpush1.msra.mxu0 0.0
    %460 = vmatprep.subr.mxu0 0.0
    %461 = vmatpush1.msra.mxu0 0.0
    %462 = vmatprep.subr.mxu0 0.0
    %463 = vmatpush1.msra.mxu0 0.0
    %464 = vmatprep.subr.mxu0 0.0
    %465 = vmatpush1.msra.mxu0 0.0
    %466 = vmatprep.subr.mxu0 0.0
    %467 = vmatpush1.msra.mxu0 0.0
    %468 = vmatprep.subr.mxu0 0.0
    %469 = vmatpush1.msra.mxu0 0.0
    %470 = vmatprep.subr.mxu0 0.0
    %471 = vmatpush1.msra.mxu0 0.0
    %472 = vmatprep.subr.mxu0 0.0
    %473 = vmatpush1.msra.mxu0 0.0
    %474 = vmatprep.subr.mxu0 0.0
    %475 = vmatpush1.msra.mxu0 0.0
    %476 = vmatprep.subr.mxu0 0.0
    %477 = vmatpush1.msra.mxu0 0.0
    %478 = vmatprep.subr.mxu0 0.0
    %479 = vmatpush1.msra.mxu0 0.0
    %480 = vmatprep.subr.mxu0 0.0
    %481 = vmatpush1.msra.mxu0 0.0
    %482 = vmatprep.mubr.f32.mxu0 0.0
    %483 = vmatmul.mubr.f32.gmra.mrb[0].mxu0 %v52
    %v484 = vpop.f32.mrb[0].mxu0
    %v485 = vadd.f32 0.0, %v484
    %v486 = vpop.f32.mrb[0].mxu0
    %v487 = vadd.f32 0.0, %v486
    %488 = vdwg.mxu0
    %v489 = vadd.f32 %v485, %v487
    %490 = vadd.xlane.f32.xlu0 %v489
    %v491 = vpop.xlane.xlu0 %490
    %v492 = vmul.f32 %v491, %v133
    %v493 = vsub.f32 %v485, %v492
    %v494 = vsub.f32 %v487, %v492
    %v495 = vmul.f32 %v493, %v493
    %v496 = vmul.f32 %v494, %v494
    %v497 = vadd.f32 %v495, %v496
    %498 = vadd.xlane.f32.xlu0 %v497
    %v499 = vpop.xlane.xlu0 %498
    %v500 = vmul.f32 %v499, %v133
    %v501 = vadd.f32 %v500, 1e-05
    %v502 = vrsqrt.pop %v501
    %v503 = vmul.f32 %v493, %v502
    %v504 = vmul.f32 %v494, %v502
    %s505 = scalar_lea.vmem [#allocation5], 8
    %v506 = vld [vmem:[%s505] sm:$0xff]
    %v508 = vcombine.high %v506, %v506
    %v509 = vsel %vm54, %v506, 0
    %v511 = vsel %vm54, %v508, 0
    %513 = vmatprep.subr.mxu0 %v511
    %514 = vmatpush1.msra.mxu0 %v509
    %515 = vmatprep.subr.mxu0 0.0
    %516 = vmatpush1.msra.mxu0 0.0
    %517 = vmatprep.subr.mxu0 0.0
    %518 = vmatpush1.msra.mxu0 0.0
    %519 = vmatprep.subr.mxu0 0.0
    %520 = vmatpush1.msra.mxu0 0.0
    %521 = vmatprep.subr.mxu0 0.0
    %522 = vmatpush1.msra.mxu0 0.0
    %523 = vmatprep.subr.mxu0 0.0
    %524 = vmatpush1.msra.mxu0 0.0
    %525 = vmatprep.subr.mxu0 0.0
    %526 = vmatpush1.msra.mxu0 0.0
    %527 = vmatprep.subr.mxu0 0.0
    %528 = vmatpush1.msra.mxu0 0.0
    %529 = vmatprep.subr.mxu0 0.0
    %530 = vmatpush1.msra.mxu0 0.0
    %531 = vmatprep.subr.mxu0 0.0
    %532 = vmatpush1.msra.mxu0 0.0
    %533 = vmatprep.subr.mxu0 0.0
    %534 = vmatpush1.msra.mxu0 0.0
    %535 = vmatprep.subr.mxu0 0.0
    %536 = vmatpush1.msra.mxu0 0.0
    %537 = vmatprep.subr.mxu0 0.0
    %538 = vmatpush1.msra.mxu0 0.0
    %539 = vmatprep.subr.mxu0 0.0
    %540 = vmatpush1.msra.mxu0 0.0
    %541 = vmatprep.subr.mxu0 0.0
    %542 = vmatpush1.msra.mxu0 0.0
    %543 = vmatprep.subr.mxu0 0.0
    %544 = vmatpush1.msra.mxu0 0.0
    %545 = vmatprep.subr.mxu0 0.0
    %546 = vmatpush1.msra.mxu0 0.0
    %547 = vmatprep.subr.mxu0 0.0
    %548 = vmatpush1.msra.mxu0 0.0
    %549 = vmatprep.subr.mxu0 0.0
    %550 = vmatpush1.msra.mxu0 0.0
    %551 = vmatprep.subr.mxu0 0.0
    %552 = vmatpush1.msra.mxu0 0.0
    %553 = vmatprep.subr.mxu0 0.0
    %554 = vmatpush1.msra.mxu0 0.0
    %555 = vmatprep.subr.mxu0 0.0
    %556 = vmatpush1.msra.mxu0 0.0
    %557 = vmatprep.subr.mxu0 0.0
    %558 = vmatpush1.msra.mxu0 0.0
    %559 = vmatprep.subr.mxu0 0.0
    %560 = vmatpush1.msra.mxu0 0.0
    %561 = vmatprep.subr.mxu0 0.0
    %562 = vmatpush1.msra.mxu0 0.0
    %563 = vmatprep.subr.mxu0 0.0
    %564 = vmatpush1.msra.mxu0 0.0
    %565 = vmatprep.subr.mxu0 0.0
    %566 = vmatpush1.msra.mxu0 0.0
    %567 = vmatprep.subr.mxu0 0.0
    %568 = vmatpush1.msra.mxu0 0.0
    %569 = vmatprep.subr.mxu0 0.0
    %570 = vmatpush1.msra.mxu0 0.0
    %571 = vmatprep.subr.mxu0 0.0
    %572 = vmatpush1.msra.mxu0 0.0
    %573 = vmatprep.subr.mxu0 0.0
    %574 = vmatpush1.msra.mxu0 0.0
    %575 = vmatprep.subr.mxu0 0.0
    %576 = vmatpush1.msra.mxu0 0.0
    %577 = vmatprep.mubr.f32.mxu0 0.0
    %578 = vmatmul.mubr.f32.gmra.mrb[0].mxu0 %v52
    %v579 = vpop.f32.mrb[0].mxu0
    %v580 = vadd.f32 0.0, %v579
    %v581 = vpop.f32.mrb[0].mxu0
    %v582 = vadd.f32 0.0, %v581
    %583 = vdwg.mxu0
    %v584 = vadd.f32 %v580, %v582
    %585 = vadd.xlane.f32.xlu0 %v584
    %v586 = vpop.xlane.xlu0 %585
    %v587 = vmul.f32 %v586, %v133
    %v588 = vsub.f32 %v580, %v587
    %v589 = vsub.f32 %v582, %v587
    %v590 = vmul.f32 %v588, %v588
    %v591 = vmul.f32 %v589, %v589
    %v592 = vadd.f32 %v590, %v591
    %593 = vadd.xlane.f32.xlu0 %v592
    %v594 = vpop.xlane.xlu0 %593
    %v595 = vmul.f32 %v594, %v133
    %v596 = vadd.f32 %v595, 1e-05
    %v597 = vrsqrt.pop %v596
    %v598 = vmul.f32 %v588, %v597
    %v599 = vmul.f32 %v589, %v597
    %s600 = scalar_lea.vmem %s2, 8
    %v601 = vld [vmem:[%s600] sm:$0xff]
    %v603 = vcombine.high %v601, %v601
    %v604 = vsel %vm54, %v601, 0
    %v606 = vsel %vm54, %v603, 0
    %608 = vmatprep.subr.mxu0 %v606
    %609 = vmatpush1.msra.mxu0 %v604
    %610 = vmatprep.subr.mxu0 0.0
    %611 = vmatpush1.msra.mxu0 0.0
    %612 = vmatprep.subr.mxu0 0.0
    %613 = vmatpush1.msra.mxu0 0.0
    %614 = vmatprep.subr.mxu0 0.0
    %615 = vmatpush1.msra.mxu0 0.0
    %616 = vmatprep.subr.mxu0 0.0
    %617 = vmatpush1.msra.mxu0 0.0
    %618 = vmatprep.subr.mxu0 0.0
    %619 = vmatpush1.msra.mxu0 0.0
    %620 = vmatprep.subr.mxu0 0.0
    %621 = vmatpush1.msra.mxu0 0.0
    %622 = vmatprep.subr.mxu0 0.0
    %623 = vmatpush1.msra.mxu0 0.0
    %624 = vmatprep.subr.mxu0 0.0
    %625 = vmatpush1.msra.mxu0 0.0
    %626 = vmatprep.subr.mxu0 0.0
    %627 = vmatpush1.msra.mxu0 0.0
    %628 = vmatprep.subr.mxu0 0.0
    %629 = vmatpush1.msra.mxu0 0.0
    %630 = vmatprep.subr.mxu0 0.0
    %631 = vmatpush1.msra.mxu0 0.0
    %632 = vmatprep.subr.mxu0 0.0
    %633 = vmatpush1.msra.mxu0 0.0
    %634 = vmatprep.subr.mxu0 0.0
    %635 = vmatpush1.msra.mxu0 0.0
    %636 = vmatprep.subr.mxu0 0.0
    %637 = vmatpush1.msra.mxu0 0.0
    %638 = vmatprep.subr.mxu0 0.0
    %639 = vmatpush1.msra.mxu0 0.0
    %640 = vmatprep.subr.mxu0 0.0
    %641 = vmatpush1.msra.mxu0 0.0
    %642 = vmatprep.subr.mxu0 0.0
    %643 = vmatpush1.msra.mxu0 0.0
    %644 = vmatprep.subr.mxu0 0.0
    %645 = vmatpush1.msra.mxu0 0.0
    %646 = vmatprep.subr.mxu0 0.0
    %647 = vmatpush1.msra.mxu0 0.0
    %648 = vmatprep.subr.mxu0 0.0
    %649 = vmatpush1.msra.mxu0 0.0
    %650 = vmatprep.subr.mxu0 0.0
    %651 = vmatpush1.msra.mxu0 0.0
    %652 = vmatprep.subr.mxu0 0.0
    %653 = vmatpush1.msra.mxu0 0.0
    %654 = vmatprep.subr.mxu0 0.0
    %655 = vmatpush1.msra.mxu0 0.0
    %656 = vmatprep.subr.mxu0 0.0
    %657 = vmatpush1.msra.mxu0 0.0
    %658 = vmatprep.subr.mxu0 0.0
    %659 = vmatpush1.msra.mxu0 0.0
    %660 = vmatprep.subr.mxu0 0.0
    %661 = vmatpush1.msra.mxu0 0.0
    %662 = vmatprep.subr.mxu0 0.0
    %663 = vmatpush1.msra.mxu0 0.0
    %664 = vmatprep.subr.mxu0 0.0
    %665 = vmatpush1.msra.mxu0 0.0
    %666 = vmatprep.subr.mxu0 0.0
    %667 = vmatpush1.msra.mxu0 0.0
    %668 = vmatprep.subr.mxu0 0.0
    %669 = vmatpush1.msra.mxu0 0.0
    %670 = vmatprep.subr.mxu0 0.0
    %671 = vmatpush1.msra.mxu0 0.0
    %672 = vmatprep.mubr.f32.mxu0 0.0
    %673 = vmatmul.mubr.f32.gmra.mrb[0].mxu0 %v52
    %v674 = vpop.f32.mrb[0].mxu0
    %v675 = vadd.f32 0.0, %v674
    %v676 = vpop.f32.mrb[0].mxu0
    %v677 = vadd.f32 0.0, %v676
    %678 = vdwg.mxu0
    %v679 = vadd.f32 %v675, %v677
    %680 = vadd.xlane.f32.xlu0 %v679
    %v681 = vpop.xlane.xlu0 %680
    %v682 = vmul.f32 %v681, %v133
    %v683 = vsub.f32 %v675, %v682
    %v684 = vsub.f32 %v677, %v682
    %v685 = vmul.f32 %v683, %v683
    %v686 = vmul.f32 %v684, %v684
    %v687 = vadd.f32 %v685, %v686
    %688 = vadd.xlane.f32.xlu0 %v687
    %v689 = vpop.xlane.xlu0 %688
    %v690 = vmul.f32 %v689, %v133
    %v691 = vadd.f32 %v690, 1e-05
    %v692 = vrsqrt.pop %v691
    %v693 = vmul.f32 %v683, %v692
    %v694 = vmul.f32 %v684, %v692
    %v695 = vsub.f32 %v503, %v598
    %v696 = vsub.f32 %v504, %v599
    %v697 = vsub.f32 %v503, %v693
    %v698 = vsub.f32 %v504, %v694
    %v699 = vmul.f32 %v695, %v695
    %v700 = vmul.f32 %v696, %v696
    %v701 = vrot.slane %v699, 4
    %v702 = vadd.f32 %v699, %v701
    %v703 = vrot.slane %v702, 2
    %v704 = vadd.f32 %v702, %v703
    %v705 = vrot.slane %v704, 1
    %v706 = vadd.f32 %v704, %v705
    %v707 = vrot.slane %v700, 4
    %v708 = vadd.f32 %v700, %v707
    %v709 = vrot.slane %v708, 2
    %v710 = vadd.f32 %v708, %v709
    %v711 = vrot.slane %v710, 1
    %v712 = vadd.f32 %v710, %v711
    %v715 = vcombine.low %v706, %v712
    %v717 = vunpack.c.l.s4 1966171168
    %v718 = vunpack.c.0.s8 %v717
    %v719 = vlaneseq
    %v720 = vshrl.u32 %v719, 7
    %v721 = vsub.s32 %v718, %v720
    %v722 = vrot.slane %v715, %v721
    %v724 = vunpack.c.l.s4 1966171168
    %v725 = vunpack.c.0.s8 %v724
    %v726 = vlaneseq
    %v727 = vshrl.u32 %v726, 7
    %v728 = vsub.s32 %v725, %v727
    %v729 = vrot.slane %v722, %v728
    %s731 = scalar_lea.vmem [#allocation7], 4
    %732 = vst.msk [vmem:[%s731] ss:$2 sm:$0x3] %vm374, %v729
    %v733 = vmul.f32 %v697, %v697
    %v734 = vmul.f32 %v698, %v698
    %v735 = vrot.slane %v733, 4
    %v736 = vadd.f32 %v733, %v735
    %v737 = vrot.slane %v736, 2
    %v738 = vadd.f32 %v736, %v737
    %v739 = vrot.slane %v738, 1
    %v740 = vadd.f32 %v738, %v739
    %v741 = vrot.slane %v734, 4
    %v742 = vadd.f32 %v734, %v741
    %v743 = vrot.slane %v742, 2
    %v744 = vadd.f32 %v742, %v743
    %v745 = vrot.slane %v744, 1
    %v746 = vadd.f32 %v744, %v745
    %v749 = vcombine.low %v740, %v746
    %v751 = vunpack.c.l.s4 1966171168
    %v752 = vunpack.c.0.s8 %v751
    %v753 = vlaneseq
    %v754 = vshrl.u32 %v753, 7
    %v755 = vsub.s32 %v752, %v754
    %v756 = vrot.slane %v749, %v755
    %v758 = vunpack.c.l.s4 1966171168
    %v759 = vunpack.c.0.s8 %v758
    %v760 = vlaneseq
    %v761 = vshrl.u32 %v760, 7
    %v762 = vsub.s32 %v759, %v761
    %v763 = vrot.slane %v756, %v762
    %s765 = scalar_lea.vmem %s731, 1 [#allocation7]
    %766 = vst.msk [vmem:[%s765] ss:$2 sm:$0x3] %vm374, %v763
    // Predicated region
    $region26: #{tpu_custom_call.1} parent=1 // pred_check
      _
    $region27: #{tpu_custom_call.1} parent=1 // pred_check_branch
      %768 = sbr.rel (0) target = $region29
    $region28: #{tpu_custom_call.1} parent=1 // pred_region
      %s770 = ssub.s32 128, 128
      %771 = vsyncadd [#allocation4], %s770
      %s772 = sshll.u32 [#allocation7], 4
      %s773 = int_to_ptr.vmem [resolvable:$true] %s772
      %778 = dma.vmem_to_hbm [thread:$0]  %s773, 128, %s4, [#allocation4], 64, 64, 4
    $region29: #{tpu_custom_call.1} parent=1 // pred_fallthru
      _
    // Predicated region
    $region30: #{tpu_custom_call.1} parent=1 // pred_check
      _
    $region31: #{tpu_custom_call.1} parent=1 // pred_check_branch
      %780 = sbr.rel (0) target = $region33
    $region32: #{tpu_custom_call.1} parent=1 // pred_region
      %781 = dma.done [#allocation4], 128
    $region33: #{tpu_custom_call.1} parent=1 // pred_fallthru
      _
    %782 = vsyncpa [#allocation3], 1
    %783 = vsyncpa [#allocation6], 1
    %784 = vsyncpa [#allocation4], 1

</llo_original>
